<compile_context>
chip_gen: v7x
topology: tpu7x:2x2x1
jax: 0.10.0
libtpu: 0.0.40
codegen_flags: <defaults>
</compile_context>

<pallas_src>
from functools import partial

import jax
import jax.numpy as jnp
from jax import lax
from jax.experimental import pallas as pl
from jax.experimental.pallas import tpu as pltpu


def _ricker_kernel(c_ref, k_ref, init_ref, out_ref):
    # c_ref:    SMEM (T,)      = alpha*(1 + bx*Temp[i] + cx*Temp[i]^2)
    # k_ref:    SMEM (1,)      = alpha*beta
    # init_ref: VMEM (1,Epad)  = perturbed initial ensemble state (zero-padded lanes)
    # out_ref:  VMEM (T,Epad)  trajectory (time on sublanes, ensemble on lanes)
    k = k_ref[0]
    T = out_ref.shape[0]

    n = init_ref[...]                          # (1, Epad)
    out_ref[pl.ds(0, 1), :] = n                # single-sublane aligned store

    if T - 1 <= 64:
        # Fully unrolled: per-step serial chain is fma -> exp (EUP) -> mul;
        # the per-step store issues in the idle vst slot under exp latency.
        for i in range(T - 1):
            c_i = c_ref[i]                     # static-index SMEM scalar read
            n = n * jnp.exp(c_i - k * n)
            out_ref[pl.ds(i + 1, 1), :] = n
    else:
        # Large-T fallback: keep working set at ~3 vregs, no code bloat.
        def body(i, n):
            n = n * jnp.exp(c_ref[i] - k * n)
            out_ref[pl.ds(i + 1, 1), :] = n
            return n
        lax.fori_loop(0, T - 1, body, n)


@partial(jax.jit, static_argnames=("ensemble_size",))
def _ricker_forward_jit(N0, Temp, model_params, key, ensemble_size):
    alpha, beta, bx, cx, sigma, phi = model_params

    temp = jnp.atleast_1d(jnp.squeeze(Temp)).astype(jnp.float32)   # (T,)
    T = int(temp.shape[0])                                          # static under jit

    # Pad ensemble axis to full vreg lane width (multiple of 128).
    E_pad = ((ensemble_size + 127) // 128) * 128

    # initial = N0 + phi * Normal(0, 0.1)   (RNG stays in plain JAX, fused by XLA)
    eps = jax.random.normal(key, (ensemble_size,), dtype=jnp.float32) * 0.1
    initial = N0.astype(jnp.float32) + phi * eps                    # (E,)
    init_row = jnp.zeros((1, E_pad), jnp.float32).at[0, :ensemble_size].set(initial)

    # Hoist the temperature term off the serial chain (vectorized, one pass).
    c_vec = (alpha * (1.0 + bx * temp + cx * temp * temp)).astype(jnp.float32)  # (T,)
    k_vec = jnp.reshape(alpha * beta, (1,)).astype(jnp.float32)                 # (1,)

    out_t = pl.pallas_call(
        _ricker_kernel,
        out_shape=jax.ShapeDtypeStruct((T, E_pad), jnp.float32),
        in_specs=[
            pl.BlockSpec(memory_space=pltpu.MemorySpace.SMEM),   # c_vec
            pl.BlockSpec(memory_space=pltpu.MemorySpace.SMEM),   # alpha*beta
            pl.BlockSpec(memory_space=pltpu.MemorySpace.VMEM),   # initial (1, E_pad)
        ],
        out_specs=pl.BlockSpec(memory_space=pltpu.MemorySpace.VMEM),
        cost_estimate=pl.CostEstimate(
            flops=4 * max(T - 1, 1) * E_pad,
            transcendentals=max(T - 1, 1) * E_pad,
            bytes_accessed=4 * (T * E_pad + E_pad + T + 1),
        ),
    )(c_vec, k_vec, init_row)

    # Slice real ensemble members, return torch (ensemble, time) layout; bands
    # fused here by XLA with the slice + transpose.
    out = out_t[:, :ensemble_size].T                               # (E, T)
    var = 2.0 * sigma
    return out, (out + var, out - var)


def ricker_ensemble_forward(N0, Temp, model_params, ensemble_size=15, key=None):
    """model_params = [alpha, beta, bx, cx, sigma(noise), phi(initial_uncertainty)]."""
    if key is None:
        key = jax.random.PRNGKey(0)
    mp = jnp.asarray(model_params, jnp.float32)
    out, (upper, lower) = _ricker_forward_jit(
        jnp.float32(N0), jnp.asarray(Temp, jnp.float32), mp, key, ensemble_size)
    return out, [upper, lower]


def ricker_ensemble_reference(N0, Temp, model_params, ensemble_size=15, key=None):
    """Pure-JAX reference mirroring the torch forward, for verification."""
    if key is None:
        key = jax.random.PRNGKey(0)
    alpha, beta, bx, cx, sigma, phi = [jnp.float32(p) for p in model_params]
    temp = jnp.atleast_1d(jnp.squeeze(jnp.asarray(Temp, jnp.float32)))
    T = temp.shape[0]
    eps = jax.random.normal(key, (ensemble_size,), dtype=jnp.float32) * 0.1
    initial = jnp.float32(N0) + phi * eps
    cols = [initial]
    for i in range(T - 1):
        n = cols[-1]
        cols.append(n * jnp.exp(alpha * (1.0 - beta * n + bx * temp[i] + cx * temp[i] ** 2)))
    out = jnp.stack(cols, axis=1)
    var = sigma * 2.0
    return out, [out + var, out - var]


if __name__ == "__main__":
    key = jax.random.PRNGKey(0)
    k_temp, k_init = jax.random.split(key)

    T = 16
    ensemble_size = 15
    # Temp shaped (T, 1) to exercise the .squeeze() in the torch forward
    Temp = jax.random.uniform(k_temp, (T, 1), minval=0.0, maxval=1.0)
    N0 = 1.0

    # Deterministic params: [alpha, beta, bx, cx] + noise(sigma) + initial_uncertainty(phi)
    params = [0.5, 0.1, 0.02, -0.01]
    sigma = 0.1
    phi = 0.05
    model_params = params + [sigma, phi]

    out, (upper, lower) = ricker_ensemble_forward(
        N0, Temp, model_params, ensemble_size=ensemble_size, key=k_init)
    jax.block_until_ready(out)

    ref_out, (ref_up, ref_lo) = ricker_ensemble_reference(
        N0, Temp, model_params, ensemble_size=ensemble_size, key=k_init)

    assert out.shape == (ensemble_size, T)
    assert upper.shape == (ensemble_size, T)
    assert lower.shape == (ensemble_size, T)
    assert jnp.allclose(out, ref_out, rtol=1e-4, atol=1e-4)
    assert jnp.allclose(upper, ref_up, rtol=1e-4, atol=1e-4)
    assert jnp.allclose(lower, ref_lo, rtol=1e-4, atol=1e-4)

    print("KERNEL_OK")
</pallas_src>

<mosaic_0001>
module attributes {stable_mosaic.version = 11 : i64} {
  func.func @_ricker_kernel(%arg0: memref<16xf32, #tpu.memory_space<smem>>, %arg1: memref<1xf32, #tpu.memory_space<smem>>, %arg2: memref<1x128xf32, #tpu.memory_space<vmem>>, %arg3: memref<16x128xf32, #tpu.memory_space<vmem>>) attributes {dimension_semantics = [], scalar_prefetch = 0 : i64, scratch_operands = 0 : i64, tpu.core_type = #tpu.core_type<tc>} {
    %c0 = arith.constant 0 : index
    %0 = memref.load %arg1[%c0] : memref<1xf32, #tpu.memory_space<smem>>
    %c0_0 = arith.constant 0 : index
    %c0_1 = arith.constant 0 : index
    %1 = vector.load %arg2[%c0_0, %c0_1] : memref<1x128xf32, #tpu.memory_space<vmem>>, vector<1x128xf32>
    %c0_2 = arith.constant 0 : index
    %c0_3 = arith.constant 0 : index
    %2 = vector.load %arg3[%c0_2, %c0_3] : memref<16x128xf32, #tpu.memory_space<vmem>>, vector<1x128xf32>
    tpu.vector_store %arg3[%c0_2, %c0_3], %1 {strides = array<i32>} : memref<16x128xf32, #tpu.memory_space<vmem>>, vector<1x128xf32>,
    %c0_4 = arith.constant 0 : index
    %3 = memref.load %arg0[%c0_4] : memref<16xf32, #tpu.memory_space<smem>>
    %4 = vector.broadcast %0 : f32 to vector<1x128xf32>
    %5 = arith.mulf %4, %1 : vector<1x128xf32>
    %6 = vector.broadcast %3 : f32 to vector<1x128xf32>
    %7 = arith.subf %6, %5 : vector<1x128xf32>
    %8 = math.exp %7 : vector<1x128xf32>
    %9 = arith.mulf %1, %8 : vector<1x128xf32>
    %c1 = arith.constant 1 : index
    %c0_5 = arith.constant 0 : index
    %10 = vector.load %arg3[%c1, %c0_5] : memref<16x128xf32, #tpu.memory_space<vmem>>, vector<1x128xf32>
    tpu.vector_store %arg3[%c1, %c0_5], %9 {strides = array<i32>} : memref<16x128xf32, #tpu.memory_space<vmem>>, vector<1x128xf32>,
    %c1_6 = arith.constant 1 : index
    %11 = memref.load %arg0[%c1_6] : memref<16xf32, #tpu.memory_space<smem>>
    %12 = vector.broadcast %0 : f32 to vector<1x128xf32>
    %13 = arith.mulf %12, %9 : vector<1x128xf32>
    %14 = vector.broadcast %11 : f32 to vector<1x128xf32>
    %15 = arith.subf %14, %13 : vector<1x128xf32>
    %16 = math.exp %15 : vector<1x128xf32>
    %17 = arith.mulf %9, %16 : vector<1x128xf32>
    %c2 = arith.constant 2 : index
    %c0_7 = arith.constant 0 : index
    %18 = vector.load %arg3[%c2, %c0_7] : memref<16x128xf32, #tpu.memory_space<vmem>>, vector<1x128xf32>
    tpu.vector_store %arg3[%c2, %c0_7], %17 {strides = array<i32>} : memref<16x128xf32, #tpu.memory_space<vmem>>, vector<1x128xf32>,
    %c2_8 = arith.constant 2 : index
    %19 = memref.load %arg0[%c2_8] : memref<16xf32, #tpu.memory_space<smem>>
    %20 = vector.broadcast %0 : f32 to vector<1x128xf32>
    %21 = arith.mulf %20, %17 : vector<1x128xf32>
    %22 = vector.broadcast %19 : f32 to vector<1x128xf32>
    %23 = arith.subf %22, %21 : vector<1x128xf32>
    %24 = math.exp %23 : vector<1x128xf32>
    %25 = arith.mulf %17, %24 : vector<1x128xf32>
    %c3 = arith.constant 3 : index
    %c0_9 = arith.constant 0 : index
    %26 = vector.load %arg3[%c3, %c0_9] : memref<16x128xf32, #tpu.memory_space<vmem>>, vector<1x128xf32>
    tpu.vector_store %arg3[%c3, %c0_9], %25 {strides = array<i32>} : memref<16x128xf32, #tpu.memory_space<vmem>>, vector<1x128xf32>,
    %c3_10 = arith.constant 3 : index
    %27 = memref.load %arg0[%c3_10] : memref<16xf32, #tpu.memory_space<smem>>
    %28 = vector.broadcast %0 : f32 to vector<1x128xf32>
    %29 = arith.mulf %28, %25 : vector<1x128xf32>
    %30 = vector.broadcast %27 : f32 to vector<1x128xf32>
    %31 = arith.subf %30, %29 : vector<1x128xf32>
    %32 = math.exp %31 : vector<1x128xf32>
    %33 = arith.mulf %25, %32 : vector<1x128xf32>
    %c4 = arith.constant 4 : index
    %c0_11 = arith.constant 0 : index
    %34 = vector.load %arg3[%c4, %c0_11] : memref<16x128xf32, #tpu.memory_space<vmem>>, vector<1x128xf32>
    tpu.vector_store %arg3[%c4, %c0_11], %33 {strides = array<i32>} : memref<16x128xf32, #tpu.memory_space<vmem>>, vector<1x128xf32>,
    %c4_12 = arith.constant 4 : index
    %35 = memref.load %arg0[%c4_12] : memref<16xf32, #tpu.memory_space<smem>>
    %36 = vector.broadcast %0 : f32 to vector<1x128xf32>
    %37 = arith.mulf %36, %33 : vector<1x128xf32>
    %38 = vector.broadcast %35 : f32 to vector<1x128xf32>
    %39 = arith.subf %38, %37 : vector<1x128xf32>
    %40 = math.exp %39 : vector<1x128xf32>
    %41 = arith.mulf %33, %40 : vector<1x128xf32>
    %c5 = arith.constant 5 : index
    %c0_13 = arith.constant 0 : index
    %42 = vector.load %arg3[%c5, %c0_13] : memref<16x128xf32, #tpu.memory_space<vmem>>, vector<1x128xf32>
    tpu.vector_store %arg3[%c5, %c0_13], %41 {strides = array<i32>} : memref<16x128xf32, #tpu.memory_space<vmem>>, vector<1x128xf32>,
    %c5_14 = arith.constant 5 : index
    %43 = memref.load %arg0[%c5_14] : memref<16xf32, #tpu.memory_space<smem>>
    %44 = vector.broadcast %0 : f32 to vector<1x128xf32>
    %45 = arith.mulf %44, %41 : vector<1x128xf32>
    %46 = vector.broadcast %43 : f32 to vector<1x128xf32>
    %47 = arith.subf %46, %45 : vector<1x128xf32>
    %48 = math.exp %47 : vector<1x128xf32>
    %49 = arith.mulf %41, %48 : vector<1x128xf32>
    %c6 = arith.constant 6 : index
    %c0_15 = arith.constant 0 : index
    %50 = vector.load %arg3[%c6, %c0_15] : memref<16x128xf32, #tpu.memory_space<vmem>>, vector<1x128xf32>
    tpu.vector_store %arg3[%c6, %c0_15], %49 {strides = array<i32>} : memref<16x128xf32, #tpu.memory_space<vmem>>, vector<1x128xf32>,
    %c6_16 = arith.constant 6 : index
    %51 = memref.load %arg0[%c6_16] : memref<16xf32, #tpu.memory_space<smem>>
    %52 = vector.broadcast %0 : f32 to vector<1x128xf32>
    %53 = arith.mulf %52, %49 : vector<1x128xf32>
    %54 = vector.broadcast %51 : f32 to vector<1x128xf32>
    %55 = arith.subf %54, %53 : vector<1x128xf32>
    %56 = math.exp %55 : vector<1x128xf32>
    %57 = arith.mulf %49, %56 : vector<1x128xf32>
    %c7 = arith.constant 7 : index
    %c0_17 = arith.constant 0 : index
    %58 = vector.load %arg3[%c7, %c0_17] : memref<16x128xf32, #tpu.memory_space<vmem>>, vector<1x128xf32>
    tpu.vector_store %arg3[%c7, %c0_17], %57 {strides = array<i32>} : memref<16x128xf32, #tpu.memory_space<vmem>>, vector<1x128xf32>,
    %c7_18 = arith.constant 7 : index
    %59 = memref.load %arg0[%c7_18] : memref<16xf32, #tpu.memory_space<smem>>
    %60 = vector.broadcast %0 : f32 to vector<1x128xf32>
    %61 = arith.mulf %60, %57 : vector<1x128xf32>
    %62 = vector.broadcast %59 : f32 to vector<1x128xf32>
    %63 = arith.subf %62, %61 : vector<1x128xf32>
    %64 = math.exp %63 : vector<1x128xf32>
    %65 = arith.mulf %57, %64 : vector<1x128xf32>
    %c8 = arith.constant 8 : index
    %c0_19 = arith.constant 0 : index
    %66 = vector.load %arg3[%c8, %c0_19] : memref<16x128xf32, #tpu.memory_space<vmem>>, vector<1x128xf32>
    tpu.vector_store %arg3[%c8, %c0_19], %65 {strides = array<i32>} : memref<16x128xf32, #tpu.memory_space<vmem>>, vector<1x128xf32>,
    %c8_20 = arith.constant 8 : index
    %67 = memref.load %arg0[%c8_20] : memref<16xf32, #tpu.memory_space<smem>>
    %68 = vector.broadcast %0 : f32 to vector<1x128xf32>
    %69 = arith.mulf %68, %65 : vector<1x128xf32>
    %70 = vector.broadcast %67 : f32 to vector<1x128xf32>
    %71 = arith.subf %70, %69 : vector<1x128xf32>
    %72 = math.exp %71 : vector<1x128xf32>
    %73 = arith.mulf %65, %72 : vector<1x128xf32>
    %c9 = arith.constant 9 : index
    %c0_21 = arith.constant 0 : index
    %74 = vector.load %arg3[%c9, %c0_21] : memref<16x128xf32, #tpu.memory_space<vmem>>, vector<1x128xf32>
    tpu.vector_store %arg3[%c9, %c0_21], %73 {strides = array<i32>} : memref<16x128xf32, #tpu.memory_space<vmem>>, vector<1x128xf32>,
    %c9_22 = arith.constant 9 : index
    %75 = memref.load %arg0[%c9_22] : memref<16xf32, #tpu.memory_space<smem>>
    %76 = vector.broadcast %0 : f32 to vector<1x128xf32>
    %77 = arith.mulf %76, %73 : vector<1x128xf32>
    %78 = vector.broadcast %75 : f32 to vector<1x128xf32>
    %79 = arith.subf %78, %77 : vector<1x128xf32>
    %80 = math.exp %79 : vector<1x128xf32>
    %81 = arith.mulf %73, %80 : vector<1x128xf32>
    %c10 = arith.constant 10 : index
    %c0_23 = arith.constant 0 : index
    %82 = vector.load %arg3[%c10, %c0_23] : memref<16x128xf32, #tpu.memory_space<vmem>>, vector<1x128xf32>
    tpu.vector_store %arg3[%c10, %c0_23], %81 {strides = array<i32>} : memref<16x128xf32, #tpu.memory_space<vmem>>, vector<1x128xf32>,
    %c10_24 = arith.constant 10 : index
    %83 = memref.load %arg0[%c10_24] : memref<16xf32, #tpu.memory_space<smem>>
    %84 = vector.broadcast %0 : f32 to vector<1x128xf32>
    %85 = arith.mulf %84, %81 : vector<1x128xf32>
    %86 = vector.broadcast %83 : f32 to vector<1x128xf32>
    %87 = arith.subf %86, %85 : vector<1x128xf32>
    %88 = math.exp %87 : vector<1x128xf32>
    %89 = arith.mulf %81, %88 : vector<1x128xf32>
    %c11 = arith.constant 11 : index
    %c0_25 = arith.constant 0 : index
    %90 = vector.load %arg3[%c11, %c0_25] : memref<16x128xf32, #tpu.memory_space<vmem>>, vector<1x128xf32>
    tpu.vector_store %arg3[%c11, %c0_25], %89 {strides = array<i32>} : memref<16x128xf32, #tpu.memory_space<vmem>>, vector<1x128xf32>,
    %c11_26 = arith.constant 11 : index
    %91 = memref.load %arg0[%c11_26] : memref<16xf32, #tpu.memory_space<smem>>
    %92 = vector.broadcast %0 : f32 to vector<1x128xf32>
    %93 = arith.mulf %92, %89 : vector<1x128xf32>
    %94 = vector.broadcast %91 : f32 to vector<1x128xf32>
    %95 = arith.subf %94, %93 : vector<1x128xf32>
    %96 = math.exp %95 : vector<1x128xf32>
    %97 = arith.mulf %89, %96 : vector<1x128xf32>
    %c12 = arith.constant 12 : index
    %c0_27 = arith.constant 0 : index
    %98 = vector.load %arg3[%c12, %c0_27] : memref<16x128xf32, #tpu.memory_space<vmem>>, vector<1x128xf32>
    tpu.vector_store %arg3[%c12, %c0_27], %97 {strides = array<i32>} : memref<16x128xf32, #tpu.memory_space<vmem>>, vector<1x128xf32>,
    %c12_28 = arith.constant 12 : index
    %99 = memref.load %arg0[%c12_28] : memref<16xf32, #tpu.memory_space<smem>>
    %100 = vector.broadcast %0 : f32 to vector<1x128xf32>
    %101 = arith.mulf %100, %97 : vector<1x128xf32>
    %102 = vector.broadcast %99 : f32 to vector<1x128xf32>
    %103 = arith.subf %102, %101 : vector<1x128xf32>
    %104 = math.exp %103 : vector<1x128xf32>
    %105 = arith.mulf %97, %104 : vector<1x128xf32>
    %c13 = arith.constant 13 : index
    %c0_29 = arith.constant 0 : index
    %106 = vector.load %arg3[%c13, %c0_29] : memref<16x128xf32, #tpu.memory_space<vmem>>, vector<1x128xf32>
    tpu.vector_store %arg3[%c13, %c0_29], %105 {strides = array<i32>} : memref<16x128xf32, #tpu.memory_space<vmem>>, vector<1x128xf32>,
    %c13_30 = arith.constant 13 : index
    %107 = memref.load %arg0[%c13_30] : memref<16xf32, #tpu.memory_space<smem>>
    %108 = vector.broadcast %0 : f32 to vector<1x128xf32>
    %109 = arith.mulf %108, %105 : vector<1x128xf32>
    %110 = vector.broadcast %107 : f32 to vector<1x128xf32>
    %111 = arith.subf %110, %109 : vector<1x128xf32>
    %112 = math.exp %111 : vector<1x128xf32>
    %113 = arith.mulf %105, %112 : vector<1x128xf32>
    %c14 = arith.constant 14 : index
    %c0_31 = arith.constant 0 : index
    %114 = vector.load %arg3[%c14, %c0_31] : memref<16x128xf32, #tpu.memory_space<vmem>>, vector<1x128xf32>
    tpu.vector_store %arg3[%c14, %c0_31], %113 {strides = array<i32>} : memref<16x128xf32, #tpu.memory_space<vmem>>, vector<1x128xf32>,
    %c14_32 = arith.constant 14 : index
    %115 = memref.load %arg0[%c14_32] : memref<16xf32, #tpu.memory_space<smem>>
    %116 = vector.broadcast %0 : f32 to vector<1x128xf32>
    %117 = arith.mulf %116, %113 : vector<1x128xf32>
    %118 = vector.broadcast %115 : f32 to vector<1x128xf32>
    %119 = arith.subf %118, %117 : vector<1x128xf32>
    %120 = math.exp %119 : vector<1x128xf32>
    %121 = arith.mulf %113, %120 : vector<1x128xf32>
    %c15 = arith.constant 15 : index
    %c0_33 = arith.constant 0 : index
    %122 = vector.load %arg3[%c15, %c0_33] : memref<16x128xf32, #tpu.memory_space<vmem>>, vector<1x128xf32>
    tpu.vector_store %arg3[%c15, %c0_33], %121 {strides = array<i32>} : memref<16x128xf32, #tpu.memory_space<vmem>>, vector<1x128xf32>,
    return
  }
}

</mosaic_0001>

<llo_original>
// kernel: _ricker_forward_jit.1
$region0: #{_ricker_forward_jit.1}
  #allocation0 [shape = 'u32[]', space=smem, size = 0x4, offset = 0x4, fixed_abs, tag = 'smem constant byte address 0x4 - core index']
  #allocation1 [shape = 'u32[144,128]{1,0:T(1,128)}', space=vmem, size = 0x12000, scoped, tag = 'internal scratch']
  #allocation2 [shape = 'f32[1]{0:T(128)S(6)}', space=smem, size = 0x200, scoped, tag = 'scoped memory for _ricker_forward_jit.1']
  %s0 = inlined_call_operand.vmem [shape: f32[16], index: 0, kind: input, shape index: {}]
  %s1 = inlined_call_operand.<no memory space> [shape: f32[1], index: 1, kind: input, shape index: {}]
  %s2 = inlined_call_operand.vmem [shape: f32[1,128], index: 2, kind: input, shape index: {}]
  %s3 = inlined_call_operand.vmem [shape: f32[16,128], index: 3, kind: output, shape index: {}]
  %s4 = sld [smem:[#allocation0]]
  $region26: #{_ricker_forward_jit.1} parent=0
    _
  %s6 = ssub.s32 1, %s4
  %s7 = scalar_select 0, %s6, %s4
  %8 = sst [smem:[#allocation2]] %s1
  $region1: #{_ricker_forward_jit.1} parent=0
    #allocation3 [shape = 'u8[512]{0}', space=smem, size = 0x200, scoped, tag = 'input window, operand 0, single buffered']
    #allocation4 [shape = 's32[1]{0}', space=sflag, size = 0x4, scoped, tag = 'scoped memory for _ricker_forward_jit.1']
    %9 = vsyncpa [#allocation4], 0
    // Predicated region
    $region2: #{_ricker_forward_jit.1} parent=1 // pred_check
      _
    $region3: #{_ricker_forward_jit.1} parent=1 // pred_check_branch
      %11 = sbr.rel (0) target = $region5
    $region4: #{_ricker_forward_jit.1} parent=1 // pred_region
      %s13 = ssub.s32 16, 16
      %14 = vsyncadd [#allocation4], %s13
      %s16 = sshll.u32 %s0, 4
      %s17 = int_to_ptr.vmem [resolvable:$true] %s16
      %19 = dma.vmem_to_smem %s17, 16, [#allocation3], [#allocation4]
    $region5: #{_ricker_forward_jit.1} parent=1 // pred_fallthru
      _
    // Predicated region
    $region6: #{_ricker_forward_jit.1} parent=1 // pred_check
      _
    $region7: #{_ricker_forward_jit.1} parent=1 // pred_check_branch
      %21 = sbr.rel (0) target = $region9
    $region8: #{_ricker_forward_jit.1} parent=1 // pred_region
      _
    $region9: #{_ricker_forward_jit.1} parent=1 // pred_fallthru
      _
    // Predicated region
    $region10: #{_ricker_forward_jit.1} parent=1 // pred_check
      _
    $region11: #{_ricker_forward_jit.1} parent=1 // pred_check_branch
      %23 = sbr.rel (0) target = $region13
    $region12: #{_ricker_forward_jit.1} parent=1 // pred_region
      _
    $region13: #{_ricker_forward_jit.1} parent=1 // pred_fallthru
      _
    // Predicated region
    $region14: #{_ricker_forward_jit.1} parent=1 // pred_check
      _
    $region15: #{_ricker_forward_jit.1} parent=1 // pred_check_branch
      %25 = sbr.rel (0) target = $region17
    $region16: #{_ricker_forward_jit.1} parent=1 // pred_region
      %26 = dma.done [#allocation4], 16
    $region17: #{_ricker_forward_jit.1} parent=1 // pred_fallthru
      _
    %27 = sfence
    %s28 = sld [smem:[#allocation2]]
    %v29 = vld [vmem:[%s2] sm:$0x1]
    %30 = vst [vmem:[%s3] sm:$0x1] %v29
    %s31 = sld [smem:[#allocation3]]
    %v32 = vstv %s28
    %v33 = vmul.f32 %v32, %v29
    %v34 = vstv %s31
    %v35 = vsub.f32 %v34, %v33
    %v36 = vmul.f32 %v35, 1.442695
    %v37 = vpow.pop %v36
    %v38 = vmul.f32 %v29, %v37
    %39 = vst [vmem:[%s3 + $0x1] sm:$0x1] %v38
    %s40 = sld [smem:[#allocation3 + $0x1]]
    %v41 = vmul.f32 %v32, %v38
    %v42 = vstv %s40
    %v43 = vsub.f32 %v42, %v41
    %v44 = vmul.f32 %v43, 1.442695
    %v45 = vpow.pop %v44
    %v46 = vmul.f32 %v38, %v45
    %47 = vst [vmem:[%s3 + $0x2] sm:$0x1] %v46
    %s48 = sld [smem:[#allocation3 + $0x2]]
    %v49 = vmul.f32 %v32, %v46
    %v50 = vstv %s48
    %v51 = vsub.f32 %v50, %v49
    %v52 = vmul.f32 %v51, 1.442695
    %v53 = vpow.pop %v52
    %v54 = vmul.f32 %v46, %v53
    %55 = vst [vmem:[%s3 + $0x3] sm:$0x1] %v54
    %s56 = sld [smem:[#allocation3 + $0x3]]
    %v57 = vmul.f32 %v32, %v54
    %v58 = vstv %s56
    %v59 = vsub.f32 %v58, %v57
    %v60 = vmul.f32 %v59, 1.442695
    %v61 = vpow.pop %v60
    %v62 = vmul.f32 %v54, %v61
    %63 = vst [vmem:[%s3 + $0x4] sm:$0x1] %v62
    %s64 = sld [smem:[#allocation3 + $0x4]]
    %v65 = vmul.f32 %v32, %v62
    %v66 = vstv %s64
    %v67 = vsub.f32 %v66, %v65
    %v68 = vmul.f32 %v67, 1.442695
    %v69 = vpow.pop %v68
    %v70 = vmul.f32 %v62, %v69
    %71 = vst [vmem:[%s3 + $0x5] sm:$0x1] %v70
    %s72 = sld [smem:[#allocation3 + $0x5]]
    %v73 = vmul.f32 %v32, %v70
    %v74 = vstv %s72
    %v75 = vsub.f32 %v74, %v73
    %v76 = vmul.f32 %v75, 1.442695
    %v77 = vpow.pop %v76
    %v78 = vmul.f32 %v70, %v77
    %79 = vst [vmem:[%s3 + $0x6] sm:$0x1] %v78
    %s80 = sld [smem:[#allocation3 + $0x6]]
    %v81 = vmul.f32 %v32, %v78
    %v82 = vstv %s80
    %v83 = vsub.f32 %v82, %v81
    %v84 = vmul.f32 %v83, 1.442695
    %v85 = vpow.pop %v84
    %v86 = vmul.f32 %v78, %v85
    %87 = vst [vmem:[%s3 + $0x7] sm:$0x1] %v86
    %s88 = sld [smem:[#allocation3 + $0x7]]
    %v89 = vmul.f32 %v32, %v86
    %v90 = vstv %s88
    %v91 = vsub.f32 %v90, %v89
    %v92 = vmul.f32 %v91, 1.442695
    %v93 = vpow.pop %v92
    %v94 = vmul.f32 %v86, %v93
    %95 = vst [vmem:[%s3 + $0x8] sm:$0x1] %v94
    %s96 = sld [smem:[#allocation3 + $0x8]]
    %v97 = vmul.f32 %v32, %v94
    %v98 = vstv %s96
    %v99 = vsub.f32 %v98, %v97
    %v100 = vmul.f32 %v99, 1.442695
    %v101 = vpow.pop %v100
    %v102 = vmul.f32 %v94, %v101
    %103 = vst [vmem:[%s3 + $0x9] sm:$0x1] %v102
    %s104 = sld [smem:[#allocation3 + $0x9]]
    %v105 = vmul.f32 %v32, %v102
    %v106 = vstv %s104
    %v107 = vsub.f32 %v106, %v105
    %v108 = vmul.f32 %v107, 1.442695
    %v109 = vpow.pop %v108
    %v110 = vmul.f32 %v102, %v109
    %111 = vst [vmem:[%s3 + $0xa] sm:$0x1] %v110
    %s112 = sld [smem:[#allocation3 + $0xa]]
    %v113 = vmul.f32 %v32, %v110
    %v114 = vstv %s112
    %v115 = vsub.f32 %v114, %v113
    %v116 = vmul.f32 %v115, 1.442695
    %v117 = vpow.pop %v116
    %v118 = vmul.f32 %v110, %v117
    %119 = vst [vmem:[%s3 + $0xb] sm:$0x1] %v118
    %s120 = sld [smem:[#allocation3 + $0xb]]
    %v121 = vmul.f32 %v32, %v118
    %v122 = vstv %s120
    %v123 = vsub.f32 %v122, %v121
    %v124 = vmul.f32 %v123, 1.442695
    %v125 = vpow.pop %v124
    %v126 = vmul.f32 %v118, %v125
    %127 = vst [vmem:[%s3 + $0xc] sm:$0x1] %v126
    %s128 = sld [smem:[#allocation3 + $0xc]]
    %v129 = vmul.f32 %v32, %v126
    %v130 = vstv %s128
    %v131 = vsub.f32 %v130, %v129
    %v132 = vmul.f32 %v131, 1.442695
    %v133 = vpow.pop %v132
    %v134 = vmul.f32 %v126, %v133
    %135 = vst [vmem:[%s3 + $0xd] sm:$0x1] %v134
    %s136 = sld [smem:[#allocation3 + $0xd]]
    %v137 = vmul.f32 %v32, %v134
    %v138 = vstv %s136
    %v139 = vsub.f32 %v138, %v137
    %v140 = vmul.f32 %v139, 1.442695
    %v141 = vpow.pop %v140
    %v142 = vmul.f32 %v134, %v141
    %143 = vst [vmem:[%s3 + $0xe] sm:$0x1] %v142
    %s144 = sld [smem:[#allocation3 + $0xe]]
    %v145 = vmul.f32 %v32, %v142
    %v146 = vstv %s144
    %v147 = vsub.f32 %v146, %v145
    %v148 = vmul.f32 %v147, 1.442695
    %v149 = vpow.pop %v148
    %v150 = vmul.f32 %v142, %v149
    %151 = vst [vmem:[%s3 + $0xf] sm:$0x1] %v150
    // Predicated region
    $region18: #{_ricker_forward_jit.1} parent=1 // pred_check
      _
    $region19: #{_ricker_forward_jit.1} parent=1 // pred_check_branch
      %153 = sbr.rel (0) target = $region21
    $region20: #{_ricker_forward_jit.1} parent=1 // pred_region
      _
    $region21: #{_ricker_forward_jit.1} parent=1 // pred_fallthru
      _
    // Predicated region
    $region22: #{_ricker_forward_jit.1} parent=1 // pred_check
      _
    $region23: #{_ricker_forward_jit.1} parent=1 // pred_check_branch
      %155 = sbr.rel (0) target = $region25
    $region24: #{_ricker_forward_jit.1} parent=1 // pred_region
      _
    $region25: #{_ricker_forward_jit.1} parent=1 // pred_fallthru
      _
    %156 = vsyncpa [#allocation4], 1

</llo_original>
